<compile_context>
chip_gen: v7x
topology: tpu7x:2x2x1
jax: 0.10.0
libtpu: 0.0.40
codegen_flags: <defaults>
</compile_context>

<pallas_src>
import functools

import numpy as np
import jax
import jax.numpy as jnp
from jax.experimental import pallas as pl
from jax.experimental.pallas import tpu as pltpu


# ----------------------------- Pallas kernel -------------------------------

def _fused_bond_mlp_kernel(row_ref, col_ref, sid_ref,
                           ta_ref, tb_ref, ts_ref,
                           w2t_ref, b2_ref, o_ref):
    # row/col/sid: (1, tile_e) int32
    # ta/tb: (H, n_pad)   ts: (H, s_pad)  (b1 already folded into ts)
    # w2t: (Cpad, H) (rows >= n_cls are zero)   b2: (Cpad, 1)   o: (Cpad, tile_e)
    tile_e = row_ref.shape[1]
    n_pad = ta_ref.shape[1]
    s_pad = ts_ref.shape[1]
    k_max = max(n_pad, s_pad)

    # Single hoisted iota, reused for all three one-hot gathers (JAX does not
    # CSE broadcast_in_dim).  n_pad / s_pad are multiples of 8, so the row
    # slices below are sublane-aligned.
    iota = jax.lax.broadcasted_iota(jnp.int32, (k_max, tile_e), 0)

    def gathered(table_ref, idx, k_pad):
        # one-hot-matmul gather: (H, k_pad) @ (k_pad, tile_e) -> (H, tile_e)
        onehot = (iota[:k_pad] == idx).astype(jnp.float32)
        return jnp.dot(table_ref[...], onehot, preferred_element_type=jnp.float32)

    h = (gathered(ta_ref, row_ref[...], n_pad)
         + gathered(tb_ref, col_ref[...], n_pad)
         + gathered(ts_ref, sid_ref[...], s_pad))          # bias rides in TS
    h = jnp.maximum(h, 0.0)                                 # MLP hidden ReLU
    o = jnp.dot(w2t_ref[...], h, preferred_element_type=jnp.float32) + b2_ref[...]
    o_ref[...] = o.astype(o_ref.dtype)


# --------------------------- tiling / budgeting -----------------------------

def _round_up(n, m):
    return ((n + m - 1) // m) * m


def _tpu_generation_info():
    """Returns (num_tensorcores_per_chip, per-tile VMEM budget, VMEM ceiling,
    default max_tile_e), keyed off the device kind (conservative fallback)."""
    kind = ""
    try:
        kind = (getattr(jax.devices()[0], "device_kind", "") or "").lower()
    except Exception:
        pass
    if "v7" in kind:                      # 2 TCs/chip, 64 MiB VMEM per TC
        return 2, 20 << 20, 48 << 20, 4096
    if "v6" in kind:                      # 1 TC, 128 MiB physical / 32 MiB scoped
        return 1, 24 << 20, 96 << 20, 8192
    if "v5" in kind:                      # 1 TC, 128 MiB physical / 16 MiB scoped
        return 1, 10 << 20, 64 << 20, 2048
    return 1, 10 << 20, 32 << 20, 2048    # unknown: be conservative


def _choose_tile_e(n_edges, n_pad, s_pad, hidden, num_tc, budget_bytes,
                   max_tile_e, lane=128):
    e_blocks = pl.cdiv(n_edges, lane)
    if num_tc >= 2 and e_blocks >= 2:
        # Keep >= 2 grid steps so dimension_semantics=("parallel",) can shard
        # the edge axis across both TensorCores (v7x).
        want_blocks = (e_blocks + 1) // 2
    else:
        # Single-TC parts: the grid is a serial loop, so pick one maximal tile.
        want_blocks = e_blocks
    tile_blocks = max(1, min(max_tile_e // lane, want_blocks))
    # Cap so per-tile intermediates (3 f32 one-hots + i32 iota + f32 h) fit the
    # generation-aware budget.
    per_block_bytes = 4 * lane * (2 * n_pad + s_pad + max(n_pad, s_pad) + hidden)
    tile_blocks = max(1, min(tile_blocks, budget_bytes // max(per_block_bytes, 1)))
    # TODO(synk): if per_block_bytes alone exceeds budget_bytes (huge atom
    # tables), switch to a real gather path instead of one-hot matmuls.
    return tile_blocks * lane


# ------------------------------ fused wrapper -------------------------------

def bond_mlp_fused_pallas(atom_feats, shape_emb, row, col, sid, w1, b1, w2, b2,
                          max_tile_e=None):
    """Fused gather + two-layer MLP over edges.  Returns TRANSPOSED logits
    (n_cls, n_edges); the caller symmetrizes/transposes in that layout."""
    n_atoms, f_atom = atom_feats.shape            # (N, 24)
    n_shapes, _ = shape_emb.shape                 # (S, 32)
    hidden = w1.shape[1]                          # 40
    n_cls = w2.shape[1]                           # 4
    n_edges = row.shape[0]

    num_tc, budget, ceiling, default_max_tile = _tpu_generation_info()
    if max_tile_e is None:
        max_tile_e = default_max_tile

    # Pre-contract the tiny tables once; transpose so the edge axis maps to
    # lanes.  b1 is folded into TS (each one-hot column sums to exactly 1).
    ta_t = (atom_feats @ w1[:f_atom]).T                      # (H, N)
    tb_t = (atom_feats @ w1[f_atom:2 * f_atom]).T            # (H, N)
    ts_t = (shape_emb @ w1[2 * f_atom:]).T + b1[:, None]     # (H, S)

    # Pad the contraction dims only to sublane granularity (8), not 128.
    n_pad = _round_up(n_atoms, 8)
    s_pad = _round_up(n_shapes, 8)
    ta_t = jnp.pad(ta_t, ((0, 0), (0, n_pad - n_atoms)))
    tb_t = jnp.pad(tb_t, ((0, 0), (0, n_pad - n_atoms)))
    ts_t = jnp.pad(ts_t, ((0, 0), (0, s_pad - n_shapes)))

    # Pad the class dim to 8 output rows (zero rows) so the store is a full
    # unmasked (8, 128) vreg write.
    c_pad = _round_up(n_cls, 8)
    w2t = jnp.pad(w2.T, ((0, c_pad - n_cls), (0, 0)))        # (Cpad, H)
    b2p = jnp.pad(b2.reshape(n_cls, 1), ((0, c_pad - n_cls), (0, 0)))

    tile_e = _choose_tile_e(n_edges, n_pad, s_pad, hidden, num_tc, budget, max_tile_e)
    n_tiles = pl.cdiv(n_edges, tile_e)
    e_pad = n_tiles * tile_e

    def pad_idx(v):
        # Only the tiny int32 index vectors are padded (pad index 0 is a valid
        # table column; the corresponding output columns are sliced away).
        v = v.astype(jnp.int32).reshape(1, -1)
        return jnp.pad(v, ((0, 0), (0, e_pad - n_edges)))

    row_p, col_p, sid_p = pad_idx(row), pad_idx(col), pad_idx(sid)

    idx_spec = pl.BlockSpec((1, tile_e), lambda i: (0, i))

    def resident(shape):
        return pl.BlockSpec(shape, lambda i: (0, 0))          # stays in VMEM

    # Explicit, generation-aware VMEM limit: per-tile intermediates + resident
    # tables + double-buffered index/output blocks, with 2x headroom.
    per_tile_bytes = 4 * tile_e * (2 * n_pad + s_pad + max(n_pad, s_pad) + hidden)
    io_bytes = 2 * (3 * tile_e * 4 + c_pad * tile_e * 4)
    table_bytes = 4 * (hidden * (2 * n_pad + s_pad) + c_pad * hidden + c_pad)
    vmem_limit = int(min(max(2 * (per_tile_bytes + io_bytes + table_bytes) + (4 << 20),
                             16 << 20), ceiling))

    out_t = pl.pallas_call(
        _fused_bond_mlp_kernel,
        out_shape=jax.ShapeDtypeStruct((c_pad, e_pad), jnp.float32),
        grid_spec=pltpu.PrefetchScalarGridSpec(
            num_scalar_prefetch=0,
            grid=(n_tiles,),
            in_specs=[
                idx_spec, idx_spec, idx_spec,                 # row / col / shape-id
                resident((hidden, n_pad)),                    # TA^T
                resident((hidden, n_pad)),                    # TB^T
                resident((hidden, s_pad)),                    # TS^T (b1 folded)
                resident((c_pad, hidden)),                    # W2^T (zero-padded)
                resident((c_pad, 1)),                         # b2  (zero-padded)
            ],
            out_specs=pl.BlockSpec((c_pad, tile_e), lambda i: (0, i)),
        ),
        compiler_params=pltpu.CompilerParams(
            dimension_semantics=("parallel",),
            vmem_limit_bytes=vmem_limit),
    )(row_p, col_p, sid_p, ta_t, tb_t, ts_t, w2t, b2p)

    return out_t[:n_cls, :n_edges]                            # (C, E) transposed slab


# --------------------------- model configuration ---------------------------

HIDDEN_SIZE = 32
DIM_CONFIG = dict(motif_seq_positional_dim=8, atom_id_dim=8, atom_charge_dim=8)
FEAT_SIZES = dict(atom_adj_feat_size=4)          # number of bond classes

ATOM_VOCAB = 16
CHARGE_VOCAB = 5
MAX_SEQ_POS = 16

INPUT_SIZE = HIDDEN_SIZE + (DIM_CONFIG['motif_seq_positional_dim']
                            + DIM_CONFIG['atom_id_dim']
                            + DIM_CONFIG['atom_charge_dim']) * 2     # = 80
MLP_HIDDEN = INPUT_SIZE // 2                                         # = 40
N_BOND = FEAT_SIZES['atom_adj_feat_size']                            # = 4


def init_params(key):
    ks = jax.random.split(key, 7)
    s = 0.05
    return dict(
        atom_id_emb=jax.random.normal(ks[0], (ATOM_VOCAB, DIM_CONFIG['atom_id_dim']), jnp.float32) * s,
        atom_charge_emb=jax.random.normal(ks[1], (CHARGE_VOCAB, DIM_CONFIG['atom_charge_dim']), jnp.float32) * s,
        seq_pos_emb=jax.random.normal(ks[2], (MAX_SEQ_POS, DIM_CONFIG['motif_seq_positional_dim']), jnp.float32) * s,
        w1=jax.random.normal(ks[3], (INPUT_SIZE, MLP_HIDDEN), jnp.float32) * s,
        b1=jax.random.normal(ks[4], (MLP_HIDDEN,), jnp.float32) * s,
        w2=jax.random.normal(ks[5], (MLP_HIDDEN, N_BOND), jnp.float32) * s,
        b2=jax.random.normal(ks[6], (N_BOND,), jnp.float32) * s,
    )


# ------------------------------ forward pass --------------------------------

@functools.partial(jax.jit, static_argnames=("use_pallas",))
def _forward_core(params, shape_embeddings, motif_atoms, motif_charges, atom_pos,
                  row, col, sid, rev_perm, use_pallas=True):
    # embedding lookups (glue, fused by XLA inside this jit)
    atom_idx_emb = jnp.take(params['atom_id_emb'], motif_atoms, axis=0)
    atom_charge_emb = jnp.take(params['atom_charge_emb'], motif_charges + 1, axis=0)
    atom_pos_emb = jnp.take(params['seq_pos_emb'], atom_pos, axis=0)
    atom_feats = jnp.concatenate([atom_idx_emb, atom_charge_emb, atom_pos_emb], axis=1)

    if use_pallas:
        logits_t = bond_mlp_fused_pallas(
            atom_feats, shape_embeddings, row, col, sid,
            params['w1'], params['b1'], params['w2'], params['b2'])   # (C, E)
        # _to_symmetric in the transposed (lane-major) layout, then one
        # transpose back to (E, C).
        return (0.5 * (logits_t + logits_t[:, rev_perm])).T
    else:  # pure-JAX reference
        mlp_in = jnp.concatenate(
            [atom_feats[row], atom_feats[col], shape_embeddings[sid]], axis=1)
        h = jnp.maximum(mlp_in @ params['w1'] + params['b1'], 0.0)
        bond_logits = h @ params['w2'] + params['b2']
        return 0.5 * (bond_logits + bond_logits[rev_perm])


def motif_bond_decoder_forward(params, shape_embeddings, batch, use_pallas=True):
    """Returns (row, col, symmetric bond logits) — the COO of the SparseTensor
    the PyTorch module returns after `_to_symmetric`."""
    row = np.asarray(batch['row'], dtype=np.int32)          # [E], sorted by (row, col)
    col = np.asarray(batch['col'], dtype=np.int32)
    rev_perm = np.asarray(batch['rev_perm'], dtype=np.int32)
    num_nodes = np.asarray(batch['num_nodes_in_shape'])

    # edges_per_shape = directed edge count per shape (host-side glue)
    deg = np.bincount(row, minlength=int(num_nodes.sum()))
    splits = np.cumsum(num_nodes)[:-1]
    edges_per_shape = np.array([d.sum() for d in np.split(deg, splits)], dtype=np.int32)
    # shape id per edge (equivalent to repeat_interleave of shape embeddings)
    sid = np.repeat(np.arange(len(num_nodes), dtype=np.int32), edges_per_shape)
    atom_pos = np.concatenate([np.arange(1, nn + 1) for nn in num_nodes]).astype(np.int32)

    logits_sym = _forward_core(
        params, shape_embeddings,
        jnp.asarray(batch['motif_atoms']), jnp.asarray(batch['motif_charges']),
        jnp.asarray(atom_pos), jnp.asarray(row), jnp.asarray(col),
        jnp.asarray(sid), jnp.asarray(rev_perm), use_pallas=use_pallas)
    return row, col, logits_sym


# ---------------------------------- demo ------------------------------------

def build_batch():
    # 3 motifs with 3, 4, 2 atoms; block-diagonal symmetric bond adjacency.
    num_nodes = np.array([3, 4, 2], dtype=np.int32)
    undirected = [(0, 1), (1, 2), (0, 2),          # motif 0 (triangle)
                  (3, 4), (4, 5), (5, 6), (3, 6),  # motif 1 (ring)
                  (7, 8)]                          # motif 2 (single bond)
    edges = []
    for (i, j) in undirected:
        edges.append((i, j))
        edges.append((j, i))
    edges = sorted(edges)                          # COO order: sorted by (row, col)
    row = np.array([e[0] for e in edges], dtype=np.int32)
    col = np.array([e[1] for e in edges], dtype=np.int32)
    lut = {(int(r), int(c)): k for k, (r, c) in enumerate(zip(row, col))}
    rev_perm = np.array([lut[(int(c), int(r))] for r, c in zip(row, col)], dtype=np.int32)

    n_atoms = int(num_nodes.sum())
    rng = np.random.RandomState(0)
    batch = dict(
        row=row, col=col, rev_perm=rev_perm,
        num_nodes_in_shape=num_nodes,
        motif_atoms=rng.randint(0, ATOM_VOCAB, size=(n_atoms,)).astype(np.int32),
        motif_charges=rng.randint(-1, 2, size=(n_atoms,)).astype(np.int32),
    )
    return batch


if __name__ == "__main__":
    key = jax.random.PRNGKey(0)
    k_params, k_shape = jax.random.split(key)
    params = init_params(k_params)

    batch = build_batch()
    n_shapes = len(batch['num_nodes_in_shape'])
    shape_embeddings = jax.random.normal(k_shape, (n_shapes, HIDDEN_SIZE), jnp.float32)

    row, col, logits = motif_bond_decoder_forward(params, shape_embeddings, batch,
                                                  use_pallas=True)
    logits = jax.block_until_ready(logits)

    # validate against pure-JAX reference (tolerance accounts for different MXU
    # pass decompositions between the fused kernel and the XLA reference path)
    _, _, logits_ref = motif_bond_decoder_forward(params, shape_embeddings, batch,
                                                  use_pallas=False)
    logits_ref = jax.block_until_ready(logits_ref)

    assert logits.shape == (row.shape[0], N_BOND)
    np.testing.assert_allclose(np.asarray(logits), np.asarray(logits_ref),
                               rtol=1e-2, atol=5e-3)
    # symmetry check: logits[(i,j)] == logits[(j,i)]
    np.testing.assert_allclose(np.asarray(logits),
                               np.asarray(logits)[batch['rev_perm']],
                               rtol=1e-6, atol=1e-6)
    print("KERNEL_OK")
</pallas_src>

<mosaic_0001>
module attributes {stable_mosaic.version = 11 : i64} {
  func.func @_fused_bond_mlp_kernel(%arg0: i32, %arg1: memref<1x128xi32, #tpu.memory_space<vmem>>, %arg2: memref<1x128xi32, #tpu.memory_space<vmem>>, %arg3: memref<1x128xi32, #tpu.memory_space<vmem>>, %arg4: memref<40x16xf32, #tpu.memory_space<vmem>>, %arg5: memref<40x16xf32, #tpu.memory_space<vmem>>, %arg6: memref<40x8xf32, #tpu.memory_space<vmem>>, %arg7: memref<8x40xf32, #tpu.memory_space<vmem>>, %arg8: memref<8x1xf32, #tpu.memory_space<vmem>>, %arg9: memref<8x128xf32, #tpu.memory_space<vmem>>) attributes {dimension_semantics = [#tpu.dimension_semantics<parallel>], iteration_bounds = array<i64: 1>, scalar_prefetch = 0 : i64, scratch_operands = 0 : i64, tpu.core_type = #tpu.core_type<tc>, window_params = [{transform_indices = @transform_0, window_bounds = array<i64: 1, 128>}, {transform_indices = @transform_1, window_bounds = array<i64: 1, 128>}, {transform_indices = @transform_2, window_bounds = array<i64: 1, 128>}, {pipeline_mode = #tpu.pipeline_mode<synchronous>, transform_indices = @transform_3, window_bounds = array<i64: 40, 16>}, {pipeline_mode = #tpu.pipeline_mode<synchronous>, transform_indices = @transform_4, window_bounds = array<i64: 40, 16>}, {pipeline_mode = #tpu.pipeline_mode<synchronous>, transform_indices = @transform_5, window_bounds = array<i64: 40, 8>}, {pipeline_mode = #tpu.pipeline_mode<synchronous>, transform_indices = @transform_6, window_bounds = array<i64: 8, 40>}, {pipeline_mode = #tpu.pipeline_mode<synchronous>, transform_indices = @transform_7, window_bounds = array<i64: 8, 1>}, {transform_indices = @transform_8, window_bounds = array<i64: 8, 128>}]} {
    %0 = tpu.iota {dimensions = array<i32: 0>} : vector<16x128xi32>
    %c0 = arith.constant 0 : index
    %c0_0 = arith.constant 0 : index
    %1 = vector.load %arg1[%c0, %c0_0] : memref<1x128xi32, #tpu.memory_space<vmem>>, vector<1x128xi32>
    %2 = vector.broadcast %1 : vector<1x128xi32> to vector<16x128xi32>
    %3 = arith.cmpi eq, %0, %2 : vector<16x128xi32>
    %4 = arith.extui %3 : vector<16x128xi1> to vector<16x128xi32>
    %5 = arith.sitofp %4 : vector<16x128xi32> to vector<16x128xf32>
    %c0_1 = arith.constant 0 : index
    %c0_2 = arith.constant 0 : index
    %6 = vector.load %arg4[%c0_1, %c0_2] : memref<40x16xf32, #tpu.memory_space<vmem>>, vector<40x16xf32>
    %cst = arith.constant dense<0.000000e+00> : vector<40x128xf32>
    %7 = tpu.matmul %6, %5, %cst {dimension_numbers = #tpu.dot_dimension_numbers<[1], [0], [0], [1], [0, 0, 1, 1], [], []>} : vector<40x16xf32>, vector<16x128xf32>, vector<40x128xf32> -> vector<40x128xf32>
    %c0_3 = arith.constant 0 : index
    %c0_4 = arith.constant 0 : index
    %8 = vector.load %arg2[%c0_3, %c0_4] : memref<1x128xi32, #tpu.memory_space<vmem>>, vector<1x128xi32>
    %9 = vector.broadcast %8 : vector<1x128xi32> to vector<16x128xi32>
    %10 = arith.cmpi eq, %0, %9 : vector<16x128xi32>
    %11 = arith.extui %10 : vector<16x128xi1> to vector<16x128xi32>
    %12 = arith.sitofp %11 : vector<16x128xi32> to vector<16x128xf32>
    %c0_5 = arith.constant 0 : index
    %c0_6 = arith.constant 0 : index
    %13 = vector.load %arg5[%c0_5, %c0_6] : memref<40x16xf32, #tpu.memory_space<vmem>>, vector<40x16xf32>
    %cst_7 = arith.constant dense<0.000000e+00> : vector<40x128xf32>
    %14 = tpu.matmul %13, %12, %cst_7 {dimension_numbers = #tpu.dot_dimension_numbers<[1], [0], [0], [1], [0, 0, 1, 1], [], []>} : vector<40x16xf32>, vector<16x128xf32>, vector<40x128xf32> -> vector<40x128xf32>
    %15 = arith.addf %7, %14 : vector<40x128xf32>
    %c0_8 = arith.constant 0 : index
    %c0_9 = arith.constant 0 : index
    %16 = vector.load %arg3[%c0_8, %c0_9] : memref<1x128xi32, #tpu.memory_space<vmem>>, vector<1x128xi32>
    %17 = vector.extract_strided_slice %0 {offsets = [0, 0], sizes = [8, 128], strides = [1, 1]} : vector<16x128xi32> to vector<8x128xi32>
    %18 = vector.broadcast %16 : vector<1x128xi32> to vector<8x128xi32>
    %19 = arith.cmpi eq, %17, %18 : vector<8x128xi32>
    %20 = arith.extui %19 : vector<8x128xi1> to vector<8x128xi32>
    %21 = arith.sitofp %20 : vector<8x128xi32> to vector<8x128xf32>
    %c0_10 = arith.constant 0 : index
    %c0_11 = arith.constant 0 : index
    %22 = vector.load %arg6[%c0_10, %c0_11] : memref<40x8xf32, #tpu.memory_space<vmem>>, vector<40x8xf32>
    %cst_12 = arith.constant dense<0.000000e+00> : vector<40x128xf32>
    %23 = tpu.matmul %22, %21, %cst_12 {dimension_numbers = #tpu.dot_dimension_numbers<[1], [0], [0], [1], [0, 0, 1, 1], [], []>} : vector<40x8xf32>, vector<8x128xf32>, vector<40x128xf32> -> vector<40x128xf32>
    %24 = arith.addf %15, %23 : vector<40x128xf32>
    %cst_13 = arith.constant 0.000000e+00 : f32
    %25 = vector.broadcast %cst_13 : f32 to vector<40x128xf32>
    %26 = arith.maximumf %24, %25 : vector<40x128xf32>
    %c0_14 = arith.constant 0 : index
    %c0_15 = arith.constant 0 : index
    %27 = vector.load %arg7[%c0_14, %c0_15] : memref<8x40xf32, #tpu.memory_space<vmem>>, vector<8x40xf32>
    %cst_16 = arith.constant dense<0.000000e+00> : vector<8x128xf32>
    %28 = tpu.matmul %27, %26, %cst_16 {dimension_numbers = #tpu.dot_dimension_numbers<[1], [0], [0], [1], [0, 0, 1, 1], [], []>} : vector<8x40xf32>, vector<40x128xf32>, vector<8x128xf32> -> vector<8x128xf32>
    %c0_17 = arith.constant 0 : index
    %c0_18 = arith.constant 0 : index
    %29 = vector.load %arg8[%c0_17, %c0_18] : memref<8x1xf32, #tpu.memory_space<vmem>>, vector<8x1xf32>
    %30 = vector.broadcast %29 : vector<8x1xf32> to vector<8x128xf32>
    %31 = arith.addf %28, %30 : vector<8x128xf32>
    %c0_19 = arith.constant 0 : index
    %c0_20 = arith.constant 0 : index
    %32 = vector.load %arg9[%c0_19, %c0_20] : memref<8x128xf32, #tpu.memory_space<vmem>>, vector<8x128xf32>
    tpu.vector_store %arg9[%c0_19, %c0_20], %31 {strides = array<i32>} : memref<8x128xf32, #tpu.memory_space<vmem>>, vector<8x128xf32>,
    return
  }
  func.func @transform_0(%arg0: i32) -> (i32, i32) {
    %c0_i32 = arith.constant 0 : i32
    %c0_i32_0 = arith.constant 0 : i32
    return %c0_i32, %arg0 : i32, i32
  }
  func.func @transform_1(%arg0: i32) -> (i32, i32) {
    %c0_i32 = arith.constant 0 : i32
    %c0_i32_0 = arith.constant 0 : i32
    return %c0_i32, %arg0 : i32, i32
  }
  func.func @transform_2(%arg0: i32) -> (i32, i32) {
    %c0_i32 = arith.constant 0 : i32
    %c0_i32_0 = arith.constant 0 : i32
    return %c0_i32, %arg0 : i32, i32
  }
  func.func @transform_3(%arg0: i32) -> (i32, i32) {
    %c0_i32 = arith.constant 0 : i32
    %c0_i32_0 = arith.constant 0 : i32
    %c0_i32_1 = arith.constant 0 : i32
    return %c0_i32, %c0_i32_0 : i32, i32
  }
  func.func @transform_4(%arg0: i32) -> (i32, i32) {
    %c0_i32 = arith.constant 0 : i32
    %c0_i32_0 = arith.constant 0 : i32
    %c0_i32_1 = arith.constant 0 : i32
    return %c0_i32, %c0_i32_0 : i32, i32
  }
  func.func @transform_5(%arg0: i32) -> (i32, i32) {
    %c0_i32 = arith.constant 0 : i32
    %c0_i32_0 = arith.constant 0 : i32
    %c0_i32_1 = arith.constant 0 : i32
    return %c0_i32, %c0_i32_0 : i32, i32
  }
  func.func @transform_6(%arg0: i32) -> (i32, i32) {
    %c0_i32 = arith.constant 0 : i32
    %c0_i32_0 = arith.constant 0 : i32
    %c0_i32_1 = arith.constant 0 : i32
    return %c0_i32, %c0_i32_0 : i32, i32
  }
  func.func @transform_7(%arg0: i32) -> (i32, i32) {
    %c0_i32 = arith.constant 0 : i32
    %c0_i32_0 = arith.constant 0 : i32
    %c0_i32_1 = arith.constant 0 : i32
    return %c0_i32, %c0_i32_0 : i32, i32
  }
  func.func @transform_8(%arg0: i32) -> (i32, i32) {
    %c0_i32 = arith.constant 0 : i32
    %c0_i32_0 = arith.constant 0 : i32
    return %c0_i32, %arg0 : i32, i32
  }
}

</mosaic_0001>

<llo_original>
// kernel: _forward_core.1
$region0: #{_forward_core.1}
  #allocation0 [shape = 'u32[]', space=smem, size = 0x4, offset = 0x4, fixed_abs, tag = 'smem constant byte address 0x4 - core index']
  #allocation1 [shape = 'u32[144,128]{1,0:T(1,128)}', space=vmem, size = 0x12000, scoped, tag = 'internal scratch']
  %s0 = inlined_call_operand.vmem [shape: s32[1,128], index: 0, kind: input, shape index: {}]
  %s1 = inlined_call_operand.vmem [shape: s32[1,128], index: 1, kind: input, shape index: {}]
  %s2 = inlined_call_operand.vmem [shape: s32[1,128], index: 2, kind: input, shape index: {}]
  %s3 = inlined_call_operand.vmem [shape: f32[40,16], index: 3, kind: input, shape index: {}]
  %s4 = inlined_call_operand.vmem [shape: f32[40,16], index: 4, kind: input, shape index: {}]
  %s5 = inlined_call_operand.vmem [shape: f32[40,8], index: 5, kind: input, shape index: {}]
  %s6 = inlined_call_operand.vmem [shape: f32[8,40], index: 6, kind: input, shape index: {}]
  %s7 = inlined_call_operand.vmem [shape: f32[8,1], index: 7, kind: input, shape index: {}]
  %s8 = inlined_call_operand.vmem [shape: f32[8,128], index: 8, kind: output, shape index: {}]
  %s9 = sld [smem:[#allocation0]]
  $region42: #{_forward_core.1} parent=0
    _
  %s11 = ssub.s32 1, %s9
  %s12 = scalar_select 0, %s11, %s9
  // Predicated region
  $region2: #{_forward_core.1} parent=0 // pred_check
    _
  $region3: #{_forward_core.1} parent=0 // pred_check_branch
    %14 = sbr.rel (0) target = $region5
  $region4: #{_forward_core.1} parent=0 // pred_region
    _
  $region5: #{_forward_core.1} parent=0 // pred_fallthru
    _
  // Predicated region
  $region6: #{_forward_core.1} parent=0 // pred_check
    _
  $region7: #{_forward_core.1} parent=0 // pred_check_branch
    %16 = sbr.rel (0) target = $region9
  $region8: #{_forward_core.1} parent=0 // pred_region
    _
  $region9: #{_forward_core.1} parent=0 // pred_fallthru
    _
  // Predicated region
  $region10: #{_forward_core.1} parent=0 // pred_check
    _
  $region11: #{_forward_core.1} parent=0 // pred_check_branch
    %18 = sbr.rel (0) target = $region13
  $region12: #{_forward_core.1} parent=0 // pred_region
    _
  $region13: #{_forward_core.1} parent=0 // pred_fallthru
    _
  // Predicated region
  $region14: #{_forward_core.1} parent=0 // pred_check
    _
  $region15: #{_forward_core.1} parent=0 // pred_check_branch
    %20 = sbr.rel (0) target = $region17
  $region16: #{_forward_core.1} parent=0 // pred_region
    _
  $region17: #{_forward_core.1} parent=0 // pred_fallthru
    _
  // Predicated region
  $region18: #{_forward_core.1} parent=0 // pred_check
    _
  $region19: #{_forward_core.1} parent=0 // pred_check_branch
    %22 = sbr.rel (0) target = $region21
  $region20: #{_forward_core.1} parent=0 // pred_region
    _
  $region21: #{_forward_core.1} parent=0 // pred_fallthru
    _
  // Predicated region
  $region22: #{_forward_core.1} parent=0 // pred_check
    _
  $region23: #{_forward_core.1} parent=0 // pred_check_branch
    %24 = sbr.rel (0) target = $region25
  $region24: #{_forward_core.1} parent=0 // pred_region
    _
  $region25: #{_forward_core.1} parent=0 // pred_fallthru
    _
  // Predicated region
  $region26: #{_forward_core.1} parent=0 // pred_check
    _
  $region27: #{_forward_core.1} parent=0 // pred_check_branch
    %26 = sbr.rel (0) target = $region29
  $region28: #{_forward_core.1} parent=0 // pred_region
    _
  $region29: #{_forward_core.1} parent=0 // pred_fallthru
    _
  // Predicated region
  $region30: #{_forward_core.1} parent=0 // pred_check
    _
  $region31: #{_forward_core.1} parent=0 // pred_check_branch
    %28 = sbr.rel (0) target = $region33
  $region32: #{_forward_core.1} parent=0 // pred_region
    _
  $region33: #{_forward_core.1} parent=0 // pred_fallthru
    _
  %v29 = vlaneseq
  %v30 = vshrl.u32 %v29, 7
  %v31 = vadd.s32 %v30, 8
  %v32 = vld [vmem:[%s0] sm:$0x1]
  %v33 = vlaneseq
  %v34 = vshrl.u32 %v33, 7
  %v35 = vsub.s32 0, %v34
  %v36 = vrot.slane %v32, %v35
  %vm37 = vcmp.eq.s32.totalorder %v30, %v36
  %vm38 = vcmp.eq.s32.totalorder %v31, %v36
  %v39 = vsel %vm37, 1, 0
  %v40 = vsel %vm38, 1, 0
  %v41 = vcvt.s32.f32 %v39
  %v42 = vcvt.s32.f32 %v40
  %v43 = vld [vmem:[%s3] sm:$0xff]
  %v44 = vld [vmem:[%s3 + $0x8] sm:$0xff]
  %v45 = vld [vmem:[%s3 + $0x10] sm:$0xff]
  %v46 = vld [vmem:[%s3 + $0x18] sm:$0xff]
  %v47 = vld [vmem:[%s3 + $0x20] sm:$0xff]
  %v48 = vld [vmem:[%s1] sm:$0x1]
  %v49 = vlaneseq
  %v50 = vshrl.u32 %v49, 7
  %v51 = vsub.s32 0, %v50
  %v52 = vrot.slane %v48, %v51
  %vm53 = vcmp.eq.s32.totalorder %v30, %v52
  %vm54 = vcmp.eq.s32.totalorder %v31, %v52
  %v55 = vsel %vm53, 1, 0
  %v56 = vsel %vm54, 1, 0
  %v57 = vcvt.s32.f32 %v55
  %v58 = vcvt.s32.f32 %v56
  %v59 = vld [vmem:[%s4] sm:$0xff]
  %v60 = vld [vmem:[%s4 + $0x8] sm:$0xff]
  %v61 = vld [vmem:[%s4 + $0x10] sm:$0xff]
  %v62 = vld [vmem:[%s4 + $0x18] sm:$0xff]
  %v63 = vld [vmem:[%s4 + $0x20] sm:$0xff]
  %vm64 = vcmask 130048
  %v66 = vsel %vm64, %v59, 0
  %v69 = vsel %vm64, %v60, 0
  %v72 = vsel %vm64, %v61, 0
  %v75 = vsel %vm64, %v62, 0
  %v78 = vsel %vm64, %v63, 0
  %80 = vmatprep.subr.mxu0 0.0
  %81 = vmatpush1.msra.mxu0 %v57
  %82 = vmatprep.subr.mxu0 0.0
  %83 = vmatpush1.msra.mxu0 %v58
  %84 = vmatprep.subr.mxu0 0.0
  %85 = vmatpush1.msra.mxu0 0.0
  %86 = vmatprep.subr.mxu0 0.0
  %87 = vmatpush1.msra.mxu0 0.0
  %88 = vmatprep.subr.mxu0 0.0
  %89 = vmatpush1.msra.mxu0 0.0
  %90 = vmatprep.subr.mxu0 0.0
  %91 = vmatpush1.msra.mxu0 0.0
  %92 = vmatprep.subr.mxu0 0.0
  %93 = vmatpush1.msra.mxu0 0.0
  %94 = vmatprep.subr.mxu0 0.0
  %95 = vmatpush1.msra.mxu0 0.0
  %96 = vmatprep.subr.mxu0 0.0
  %97 = vmatpush1.msra.mxu0 0.0
  %98 = vmatprep.subr.mxu0 0.0
  %99 = vmatpush1.msra.mxu0 0.0
  %100 = vmatprep.subr.mxu0 0.0
  %101 = vmatpush1.msra.mxu0 0.0
  %102 = vmatprep.subr.mxu0 0.0
  %103 = vmatpush1.msra.mxu0 0.0
  %104 = vmatprep.subr.mxu0 0.0
  %105 = vmatpush1.msra.mxu0 0.0
  %106 = vmatprep.subr.mxu0 0.0
  %107 = vmatpush1.msra.mxu0 0.0
  %108 = vmatprep.subr.mxu0 0.0
  %109 = vmatpush1.msra.mxu0 0.0
  %110 = vmatprep.subr.mxu0 0.0
  %111 = vmatpush1.msra.mxu0 0.0
  %112 = vmatprep.subr.mxu0 0.0
  %113 = vmatpush1.msra.mxu0 0.0
  %114 = vmatprep.subr.mxu0 0.0
  %115 = vmatpush1.msra.mxu0 0.0
  %116 = vmatprep.subr.mxu0 0.0
  %117 = vmatpush1.msra.mxu0 0.0
  %118 = vmatprep.subr.mxu0 0.0
  %119 = vmatpush1.msra.mxu0 0.0
  %120 = vmatprep.subr.mxu0 0.0
  %121 = vmatpush1.msra.mxu0 0.0
  %122 = vmatprep.subr.mxu0 0.0
  %123 = vmatpush1.msra.mxu0 0.0
  %124 = vmatprep.subr.mxu0 0.0
  %125 = vmatpush1.msra.mxu0 0.0
  %126 = vmatprep.subr.mxu0 0.0
  %127 = vmatpush1.msra.mxu0 0.0
  %128 = vmatprep.subr.mxu0 0.0
  %129 = vmatpush1.msra.mxu0 0.0
  %130 = vmatprep.subr.mxu0 0.0
  %131 = vmatpush1.msra.mxu0 0.0
  %132 = vmatprep.subr.mxu0 0.0
  %133 = vmatpush1.msra.mxu0 0.0
  %134 = vmatprep.subr.mxu0 0.0
  %135 = vmatpush1.msra.mxu0 0.0
  %136 = vmatprep.subr.mxu0 0.0
  %137 = vmatpush1.msra.mxu0 0.0
  %138 = vmatprep.subr.mxu0 0.0
  %139 = vmatpush1.msra.mxu0 0.0
  %140 = vmatprep.subr.mxu0 0.0
  %141 = vmatpush1.msra.mxu0 0.0
  %142 = vmatprep.subr.mxu0 0.0
  %143 = vmatpush1.msra.mxu0 0.0
  %144 = vmatprep.mubr.f32.mxu0 0.0
  %145 = vmatmul.mubr.f32.gmra.mrb[0].mxu0 %v66
  %v146 = vpop.f32.mrb[0].mxu0
  %v147 = vadd.f32 0.0, %v146
  %v148 = vpop.f32.mrb[0].mxu0
  %149 = vmatprep.mubr.f32.mxu0 0.0
  %150 = vmatmul.mubr.f32.gmra.mrb[0].mxu0 %v69
  %v151 = vpop.f32.mrb[0].mxu0
  %v152 = vadd.f32 0.0, %v151
  %v153 = vpop.f32.mrb[0].mxu0
  %154 = vmatprep.mubr.f32.mxu0 0.0
  %155 = vmatmul.mubr.f32.gmra.mrb[0].mxu0 %v72
  %v156 = vpop.f32.mrb[0].mxu0
  %v157 = vadd.f32 0.0, %v156
  %v158 = vpop.f32.mrb[0].mxu0
  %159 = vmatprep.mubr.f32.mxu0 0.0
  %160 = vmatmul.mubr.f32.gmra.mrb[0].mxu0 %v75
  %v161 = vpop.f32.mrb[0].mxu0
  %v162 = vadd.f32 0.0, %v161
  %v163 = vpop.f32.mrb[0].mxu0
  %164 = vmatprep.mubr.f32.mxu0 0.0
  %165 = vmatmul.mubr.f32.gmra.mrb[0].mxu0 %v78
  %v166 = vpop.f32.mrb[0].mxu0
  %v167 = vadd.f32 0.0, %v166
  %v168 = vpop.f32.mrb[0].mxu0
  %169 = vdwg.mxu0
  %v171 = vsel %vm64, %v43, 0
  %v174 = vsel %vm64, %v44, 0
  %v177 = vsel %vm64, %v45, 0
  %v180 = vsel %vm64, %v46, 0
  %v183 = vsel %vm64, %v47, 0
  %185 = vmatprep.subr.mxu0 0.0
  %186 = vmatpush1.msra.mxu0 %v41
  %187 = vmatprep.subr.mxu0 0.0
  %188 = vmatpush1.msra.mxu0 %v42
  %189 = vmatprep.subr.mxu0 0.0
  %190 = vmatpush1.msra.mxu0 0.0
  %191 = vmatprep.subr.mxu0 0.0
  %192 = vmatpush1.msra.mxu0 0.0
  %193 = vmatprep.subr.mxu0 0.0
  %194 = vmatpush1.msra.mxu0 0.0
  %195 = vmatprep.subr.mxu0 0.0
  %196 = vmatpush1.msra.mxu0 0.0
  %197 = vmatprep.subr.mxu0 0.0
  %198 = vmatpush1.msra.mxu0 0.0
  %199 = vmatprep.subr.mxu0 0.0
  %200 = vmatpush1.msra.mxu0 0.0
  %201 = vmatprep.subr.mxu0 0.0
  %202 = vmatpush1.msra.mxu0 0.0
  %203 = vmatprep.subr.mxu0 0.0
  %204 = vmatpush1.msra.mxu0 0.0
  %205 = vmatprep.subr.mxu0 0.0
  %206 = vmatpush1.msra.mxu0 0.0
  %207 = vmatprep.subr.mxu0 0.0
  %208 = vmatpush1.msra.mxu0 0.0
  %209 = vmatprep.subr.mxu0 0.0
  %210 = vmatpush1.msra.mxu0 0.0
  %211 = vmatprep.subr.mxu0 0.0
  %212 = vmatpush1.msra.mxu0 0.0
  %213 = vmatprep.subr.mxu0 0.0
  %214 = vmatpush1.msra.mxu0 0.0
  %215 = vmatprep.subr.mxu0 0.0
  %216 = vmatpush1.msra.mxu0 0.0
  %217 = vmatprep.subr.mxu0 0.0
  %218 = vmatpush1.msra.mxu0 0.0
  %219 = vmatprep.subr.mxu0 0.0
  %220 = vmatpush1.msra.mxu0 0.0
  %221 = vmatprep.subr.mxu0 0.0
  %222 = vmatpush1.msra.mxu0 0.0
  %223 = vmatprep.subr.mxu0 0.0
  %224 = vmatpush1.msra.mxu0 0.0
  %225 = vmatprep.subr.mxu0 0.0
  %226 = vmatpush1.msra.mxu0 0.0
  %227 = vmatprep.subr.mxu0 0.0
  %228 = vmatpush1.msra.mxu0 0.0
  %229 = vmatprep.subr.mxu0 0.0
  %230 = vmatpush1.msra.mxu0 0.0
  %231 = vmatprep.subr.mxu0 0.0
  %232 = vmatpush1.msra.mxu0 0.0
  %233 = vmatprep.subr.mxu0 0.0
  %234 = vmatpush1.msra.mxu0 0.0
  %235 = vmatprep.subr.mxu0 0.0
  %236 = vmatpush1.msra.mxu0 0.0
  %237 = vmatprep.subr.mxu0 0.0
  %238 = vmatpush1.msra.mxu0 0.0
  %239 = vmatprep.subr.mxu0 0.0
  %240 = vmatpush1.msra.mxu0 0.0
  %241 = vmatprep.subr.mxu0 0.0
  %242 = vmatpush1.msra.mxu0 0.0
  %243 = vmatprep.subr.mxu0 0.0
  %244 = vmatpush1.msra.mxu0 0.0
  %245 = vmatprep.subr.mxu0 0.0
  %246 = vmatpush1.msra.mxu0 0.0
  %247 = vmatprep.subr.mxu0 0.0
  %248 = vmatpush1.msra.mxu0 0.0
  %249 = vmatprep.mubr.f32.mxu0 0.0
  %250 = vmatmul.mubr.f32.gmra.mrb[0].mxu0 %v171
  %v251 = vpop.f32.mrb[0].mxu0
  %v252 = vadd.f32 %v147, %v251
  %v253 = vpop.f32.mrb[0].mxu0
  %254 = vmatprep.mubr.f32.mxu0 0.0
  %255 = vmatmul.mubr.f32.gmra.mrb[0].mxu0 %v174
  %v256 = vpop.f32.mrb[0].mxu0
  %v257 = vadd.f32 %v152, %v256
  %v258 = vpop.f32.mrb[0].mxu0
  %259 = vmatprep.mubr.f32.mxu0 0.0
  %260 = vmatmul.mubr.f32.gmra.mrb[0].mxu0 %v177
  %v261 = vpop.f32.mrb[0].mxu0
  %v262 = vadd.f32 %v157, %v261
  %v263 = vpop.f32.mrb[0].mxu0
  %264 = vmatprep.mubr.f32.mxu0 0.0
  %265 = vmatmul.mubr.f32.gmra.mrb[0].mxu0 %v180
  %v266 = vpop.f32.mrb[0].mxu0
  %v267 = vadd.f32 %v162, %v266
  %v268 = vpop.f32.mrb[0].mxu0
  %269 = vmatprep.mubr.f32.mxu0 0.0
  %270 = vmatmul.mubr.f32.gmra.mrb[0].mxu0 %v183
  %v271 = vpop.f32.mrb[0].mxu0
  %v272 = vadd.f32 %v167, %v271
  %v273 = vpop.f32.mrb[0].mxu0
  %274 = vdwg.mxu0
  %v275 = vld [vmem:[%s2] sm:$0x1]
  %v276 = vlaneseq
  %v277 = vshrl.u32 %v276, 7
  %v278 = vsub.s32 0, %v277
  %v279 = vrot.slane %v275, %v278
  %vm280 = vcmp.eq.s32.totalorder %v30, %v279
  %v281 = vsel %vm280, 1, 0
  %v282 = vcvt.s32.f32 %v281
  %v283 = vld [vmem:[%s5] sm:$0xff]
  %v284 = vld [vmem:[%s5 + $0x8] sm:$0xff]
  %v285 = vld [vmem:[%s5 + $0x10] sm:$0xff]
  %v286 = vld [vmem:[%s5 + $0x18] sm:$0xff]
  %v287 = vld [vmem:[%s5 + $0x20] sm:$0xff]
  %vm288 = vcmask 64512
  %v290 = vsel %vm288, %v283, 0
  %v293 = vsel %vm288, %v284, 0
  %v296 = vsel %vm288, %v285, 0
  %v299 = vsel %vm288, %v286, 0
  %v302 = vsel %vm288, %v287, 0
  %304 = vmatprep.subr.mxu0 0.0
  %305 = vmatpush1.msra.mxu0 %v282
  %306 = vmatprep.subr.mxu0 0.0
  %307 = vmatpush1.msra.mxu0 0.0
  %308 = vmatprep.subr.mxu0 0.0
  %309 = vmatpush1.msra.mxu0 0.0
  %310 = vmatprep.subr.mxu0 0.0
  %311 = vmatpush1.msra.mxu0 0.0
  %312 = vmatprep.subr.mxu0 0.0
  %313 = vmatpush1.msra.mxu0 0.0
  %314 = vmatprep.subr.mxu0 0.0
  %315 = vmatpush1.msra.mxu0 0.0
  %316 = vmatprep.subr.mxu0 0.0
  %317 = vmatpush1.msra.mxu0 0.0
  %318 = vmatprep.subr.mxu0 0.0
  %319 = vmatpush1.msra.mxu0 0.0
  %320 = vmatprep.subr.mxu0 0.0
  %321 = vmatpush1.msra.mxu0 0.0
  %322 = vmatprep.subr.mxu0 0.0
  %323 = vmatpush1.msra.mxu0 0.0
  %324 = vmatprep.subr.mxu0 0.0
  %325 = vmatpush1.msra.mxu0 0.0
  %326 = vmatprep.subr.mxu0 0.0
  %327 = vmatpush1.msra.mxu0 0.0
  %328 = vmatprep.subr.mxu0 0.0
  %329 = vmatpush1.msra.mxu0 0.0
  %330 = vmatprep.subr.mxu0 0.0
  %331 = vmatpush1.msra.mxu0 0.0
  %332 = vmatprep.subr.mxu0 0.0
  %333 = vmatpush1.msra.mxu0 0.0
  %334 = vmatprep.subr.mxu0 0.0
  %335 = vmatpush1.msra.mxu0 0.0
  %336 = vmatprep.subr.mxu0 0.0
  %337 = vmatpush1.msra.mxu0 0.0
  %338 = vmatprep.subr.mxu0 0.0
  %339 = vmatpush1.msra.mxu0 0.0
  %340 = vmatprep.subr.mxu0 0.0
  %341 = vmatpush1.msra.mxu0 0.0
  %342 = vmatprep.subr.mxu0 0.0
  %343 = vmatpush1.msra.mxu0 0.0
  %344 = vmatprep.subr.mxu0 0.0
  %345 = vmatpush1.msra.mxu0 0.0
  %346 = vmatprep.subr.mxu0 0.0
  %347 = vmatpush1.msra.mxu0 0.0
  %348 = vmatprep.subr.mxu0 0.0
  %349 = vmatpush1.msra.mxu0 0.0
  %350 = vmatprep.subr.mxu0 0.0
  %351 = vmatpush1.msra.mxu0 0.0
  %352 = vmatprep.subr.mxu0 0.0
  %353 = vmatpush1.msra.mxu0 0.0
  %354 = vmatprep.subr.mxu0 0.0
  %355 = vmatpush1.msra.mxu0 0.0
  %356 = vmatprep.subr.mxu0 0.0
  %357 = vmatpush1.msra.mxu0 0.0
  %358 = vmatprep.subr.mxu0 0.0
  %359 = vmatpush1.msra.mxu0 0.0
  %360 = vmatprep.subr.mxu0 0.0
  %361 = vmatpush1.msra.mxu0 0.0
  %362 = vmatprep.subr.mxu0 0.0
  %363 = vmatpush1.msra.mxu0 0.0
  %364 = vmatprep.subr.mxu0 0.0
  %365 = vmatpush1.msra.mxu0 0.0
  %366 = vmatprep.subr.mxu0 0.0
  %367 = vmatpush1.msra.mxu0 0.0
  %368 = vmatprep.mubr.f32.mxu0 0.0
  %369 = vmatmul.mubr.f32.gmra.mrb[0].mxu0 %v290
  %v370 = vpop.f32.mrb[0].mxu0
  %v371 = vadd.f32 0.0, %v370
  %v372 = vpop.f32.mrb[0].mxu0
  %373 = vmatprep.mubr.f32.mxu0 0.0
  %374 = vmatmul.mubr.f32.gmra.mrb[0].mxu0 %v293
  %v375 = vpop.f32.mrb[0].mxu0
  %v376 = vadd.f32 0.0, %v375
  %v377 = vpop.f32.mrb[0].mxu0
  %378 = vmatprep.mubr.f32.mxu0 0.0
  %379 = vmatmul.mubr.f32.gmra.mrb[0].mxu0 %v296
  %v380 = vpop.f32.mrb[0].mxu0
  %v381 = vadd.f32 0.0, %v380
  %v382 = vpop.f32.mrb[0].mxu0
  %383 = vmatprep.mubr.f32.mxu0 0.0
  %384 = vmatmul.mubr.f32.gmra.mrb[0].mxu0 %v299
  %v385 = vpop.f32.mrb[0].mxu0
  %v386 = vadd.f32 0.0, %v385
  %v387 = vpop.f32.mrb[0].mxu0
  %388 = vmatprep.mubr.f32.mxu0 0.0
  %389 = vmatmul.mubr.f32.gmra.mrb[0].mxu0 %v302
  %v390 = vpop.f32.mrb[0].mxu0
  %v391 = vadd.f32 0.0, %v390
  %v392 = vpop.f32.mrb[0].mxu0
  %393 = vdwg.mxu0
  %v394 = vadd.f32 %v252, %v371
  %v395 = vadd.f32 %v257, %v376
  %v396 = vadd.f32 %v262, %v381
  %v397 = vadd.f32 %v267, %v386
  %v398 = vadd.f32 %v272, %v391
  %v399 = vmax.f32 %v394, 0.0
  %v400 = vmax.f32 %v395, 0.0
  %v401 = vmax.f32 %v396, 0.0
  %v402 = vmax.f32 %v397, 0.0
  %v403 = vmax.f32 %v398, 0.0
  %v404 = vld [vmem:[%s6] sm:$0xff]
  %v405 = vld [vmem:[%s7] sm:$0xff]
  %407 = vset.pattern.permute.xlu0 0
  %408 = vperm.xlu0 %407, %v405
  %v409 = vpop.permute.xlu0 %408
  %vm411 = vcmask 326656
  %v413 = vsel %vm411, %v404, 0
  %415 = vmatprep.subr.mxu0 0.0
  %416 = vmatpush1.msra.mxu0 %v399
  %417 = vmatprep.subr.mxu0 0.0
  %418 = vmatpush1.msra.mxu0 %v400
  %419 = vmatprep.subr.mxu0 0.0
  %420 = vmatpush1.msra.mxu0 %v401
  %421 = vmatprep.subr.mxu0 0.0
  %422 = vmatpush1.msra.mxu0 %v402
  %423 = vmatprep.subr.mxu0 0.0
  %424 = vmatpush1.msra.mxu0 %v403
  %425 = vmatprep.subr.mxu0 0.0
  %426 = vmatpush1.msra.mxu0 0.0
  %427 = vmatprep.subr.mxu0 0.0
  %428 = vmatpush1.msra.mxu0 0.0
  %429 = vmatprep.subr.mxu0 0.0
  %430 = vmatpush1.msra.mxu0 0.0
  %431 = vmatprep.subr.mxu0 0.0
  %432 = vmatpush1.msra.mxu0 0.0
  %433 = vmatprep.subr.mxu0 0.0
  %434 = vmatpush1.msra.mxu0 0.0
  %435 = vmatprep.subr.mxu0 0.0
  %436 = vmatpush1.msra.mxu0 0.0
  %437 = vmatprep.subr.mxu0 0.0
  %438 = vmatpush1.msra.mxu0 0.0
  %439 = vmatprep.subr.mxu0 0.0
  %440 = vmatpush1.msra.mxu0 0.0
  %441 = vmatprep.subr.mxu0 0.0
  %442 = vmatpush1.msra.mxu0 0.0
  %443 = vmatprep.subr.mxu0 0.0
  %444 = vmatpush1.msra.mxu0 0.0
  %445 = vmatprep.subr.mxu0 0.0
  %446 = vmatpush1.msra.mxu0 0.0
  %447 = vmatprep.subr.mxu0 0.0
  %448 = vmatpush1.msra.mxu0 0.0
  %449 = vmatprep.subr.mxu0 0.0
  %450 = vmatpush1.msra.mxu0 0.0
  %451 = vmatprep.subr.mxu0 0.0
  %452 = vmatpush1.msra.mxu0 0.0
  %453 = vmatprep.subr.mxu0 0.0
  %454 = vmatpush1.msra.mxu0 0.0
  %455 = vmatprep.subr.mxu0 0.0
  %456 = vmatpush1.msra.mxu0 0.0
  %457 = vmatprep.subr.mxu0 0.0
  %458 = vmatpush1.msra.mxu0 0.0
  %459 = vmatprep.subr.mxu0 0.0
  %460 = vmatpush1.msra.mxu0 0.0
  %461 = vmatprep.subr.mxu0 0.0
  %462 = vmatpush1.msra.mxu0 0.0
  %463 = vmatprep.subr.mxu0 0.0
  %464 = vmatpush1.msra.mxu0 0.0
  %465 = vmatprep.subr.mxu0 0.0
  %466 = vmatpush1.msra.mxu0 0.0
  %467 = vmatprep.subr.mxu0 0.0
  %468 = vmatpush1.msra.mxu0 0.0
  %469 = vmatprep.subr.mxu0 0.0
  %470 = vmatpush1.msra.mxu0 0.0
  %471 = vmatprep.subr.mxu0 0.0
  %472 = vmatpush1.msra.mxu0 0.0
  %473 = vmatprep.subr.mxu0 0.0
  %474 = vmatpush1.msra.mxu0 0.0
  %475 = vmatprep.subr.mxu0 0.0
  %476 = vmatpush1.msra.mxu0 0.0
  %477 = vmatprep.subr.mxu0 0.0
  %478 = vmatpush1.msra.mxu0 0.0
  %479 = vmatprep.mubr.f32.mxu0 0.0
  %480 = vmatmul.mubr.f32.gmra.mrb[0].mxu0 %v413
  %v481 = vpop.f32.mrb[0].mxu0
  %v482 = vadd.f32 %v409, %v481
  %v483 = vpop.f32.mrb[0].mxu0
  %484 = vdwg.mxu0
  %485 = vst [vmem:[%s8] sm:$0xff] %v482
  // Predicated region
  $region34: #{_forward_core.1} parent=0 // pred_check
    _
  $region35: #{_forward_core.1} parent=0 // pred_check_branch
    %487 = sbr.rel (0) target = $region37
  $region36: #{_forward_core.1} parent=0 // pred_region
    _
  $region37: #{_forward_core.1} parent=0 // pred_fallthru
    _
  // Predicated region
  $region38: #{_forward_core.1} parent=0 // pred_check
    _
  $region39: #{_forward_core.1} parent=0 // pred_check_branch
    %489 = sbr.rel (0) target = $region41
  $region40: #{_forward_core.1} parent=0 // pred_region
    _
  $region41: #{_forward_core.1} parent=0 // pred_fallthru
    _

</llo_original>
